<compile_context>
chip_gen: v7x
topology: tpu7x:2x2x1
jax: 0.10.0
libtpu: 0.0.40
codegen_flags: <defaults>
</compile_context>

<pallas_src>
import jax
import jax.numpy as jnp
from jax.experimental import pallas as pl
from jax.experimental.pallas import tpu as pltpu


# ----------------------------- kernel body -----------------------------------


def _dueling_kernel(x_ref,
                    w1_ref, b1_ref,
                    w2_ref, b2_ref,
                    wb1_ref, bb1_ref,      # fused [v1 | a1] stage
                    wb2_ref, bb2_ref,      # fused block-diagonal [v2 | a2] stage
                    q_ref):
    f32 = jnp.float32
    x = x_ref[...]
    cd = x.dtype                      # compute (MXU operand) dtype

    # fc1 -> relu   (low-precision operands on the MXU, f32 accumulate / VPU)
    h = jnp.dot(x, w1_ref[...], preferred_element_type=f32) + b1_ref[...]
    h = jnp.maximum(h, 0.0)

    # fc2 -> relu
    h = jnp.dot(h.astype(cd), w2_ref[...], preferred_element_type=f32) + b2_ref[...]
    h = jnp.maximum(h, 0.0)

    # fused branch stage 1: [v1 | a1] -> relu   (single (64,64) matmul)
    hb = jnp.dot(h.astype(cd), wb1_ref[...], preferred_element_type=f32) + bb1_ref[...]
    hb = jnp.maximum(hb, 0.0)

    # fused branch stage 2: block-diagonal [v2 | a2] -> (TB, 1 + A) slab [v | a]
    s = jnp.dot(hb.astype(cd), wb2_ref[...], preferred_element_type=f32) + bb2_ref[...]

    v = s[:, 0:1]                     # (TB, 1)
    a = s[:, 1:]                      # (TB, A)
    q_ref[...] = v + a - jnp.mean(a, axis=1, keepdims=True)


# ----------------------------- host-side glue ---------------------------------


def prepare_params(params, compute_dtype=jnp.bfloat16):
    """One-time packing of PyTorch-layout params.

    Transposes weights to (in, out), fuses the value/advantage branches, and
    casts matmul operands to `compute_dtype`.  Call this ONCE outside the hot
    loop; biases stay f32 (VPU math is f32 on all generations).
    """
    def wt(w):
        return jnp.asarray(w, jnp.float32).T.astype(compute_dtype)

    def bt(b):
        return jnp.asarray(b, jnp.float32).reshape(1, -1)

    action_size = params["a2_w"].shape[0]

    # Fused stage 1: columns [0:32] = value hidden, [32:64] = advantage hidden.
    wb1 = jnp.concatenate([wt(params["v1_w"]), wt(params["a1_w"])], axis=1)
    bb1 = jnp.concatenate([bt(params["v1_b"]), bt(params["a1_b"])], axis=1)

    # Fused stage 2: block-diagonal (64, 1 + A); column 0 = V, columns 1.. = A.
    wv2 = jnp.asarray(params["v2_w"], jnp.float32).T          # (32, 1)
    wa2 = jnp.asarray(params["a2_w"], jnp.float32).T          # (32, A)
    wb2 = jnp.zeros((64, 1 + action_size), jnp.float32)
    wb2 = wb2.at[:32, 0:1].set(wv2)
    wb2 = wb2.at[32:, 1:].set(wa2)
    wb2 = wb2.astype(compute_dtype)
    bb2 = jnp.concatenate([bt(params["v2_b"]), bt(params["a2_b"])], axis=1)

    return dict(
        w1=wt(params["fc1_w"]), b1=bt(params["fc1_b"]),
        w2=wt(params["fc2_w"]), b2=bt(params["fc2_b"]),
        wb1=wb1, bb1=bb1, wb2=wb2, bb2=bb2,
        action_size=action_size,
        compute_dtype=compute_dtype,
    )


def _round_up(n, m):
    return ((n + m - 1) // m) * m


def dueling_forward(x, prep, *, tb=None):
    """x: (B, state_size).  prep: output of prepare_params()."""
    B, state_size = x.shape
    A = prep["action_size"]
    cd = prep["compute_dtype"]

    # Batch tile: multiple of 16 sublanes (safe for bf16 packing), capped so the
    # per-step VMEM footprint stays tiny even under v7x's 64 MiB physical VMEM.
    if tb is None:
        tb = min(512, _round_up(B, 16))
    tb = _round_up(tb, 16)
    b_pad = _round_up(B, tb)

    xk = x.astype(cd)
    if b_pad != B:
        xk = jnp.pad(xk, ((0, b_pad - B), (0, 0)))

    weights = (prep["w1"], prep["b1"], prep["w2"], prep["b2"],
               prep["wb1"], prep["bb1"], prep["wb2"], prep["bb2"])

    def const_spec(arr):
        nd = arr.ndim
        # Bind rank explicitly to avoid late-binding closure bugs.
        return pl.BlockSpec(arr.shape, lambda i, _nd=nd: (0,) * _nd)

    in_specs = [pl.BlockSpec((tb, state_size), lambda i: (i, 0))]
    in_specs += [const_spec(w) for w in weights]
    out_spec = pl.BlockSpec((tb, A), lambda i: (i, 0))

    q = pl.pallas_call(
        _dueling_kernel,
        out_shape=jax.ShapeDtypeStruct((b_pad, A), jnp.float32),
        grid=(b_pad // tb,),
        in_specs=in_specs,
        out_specs=out_spec,
        compiler_params=pltpu.CompilerParams(
            dimension_semantics=("parallel",)),
    )(xk, *weights)

    return q[:B] if b_pad != B else q


# ----------------------------- test harness -----------------------------------


def _make_params(key, state_size, action_size):
    """Deterministic synthetic parameters with PyTorch nn.Linear shapes."""
    dims = {
        "fc1": (64, state_size),
        "fc2": (64, 64),
        "v1": (32, 64),
        "v2": (1, 32),
        "a1": (32, 64),
        "a2": (action_size, 32),
    }
    params = {}
    for name, (out_f, in_f) in dims.items():
        key, kw, kb = jax.random.split(key, 3)
        bound = 1.0 / (in_f ** 0.5)
        params[f"{name}_w"] = jax.random.uniform(
            kw, (out_f, in_f), jnp.float32, -bound, bound)
        params[f"{name}_b"] = jax.random.uniform(
            kb, (out_f,), jnp.float32, -bound, bound)
    return params


def _reference_forward(x, params):
    """Pure-JAX reference mirroring the PyTorch module (f32)."""
    def lin(h, w, b):
        return h @ w.T + b

    h = jax.nn.relu(lin(x, params["fc1_w"], params["fc1_b"]))
    h = jax.nn.relu(lin(h, params["fc2_w"], params["fc2_b"]))
    v = jax.nn.relu(lin(h, params["v1_w"], params["v1_b"]))
    v = lin(v, params["v2_w"], params["v2_b"])
    a = jax.nn.relu(lin(h, params["a1_w"], params["a1_b"]))
    a = lin(a, params["a2_w"], params["a2_b"])
    return v + a - a.mean(axis=1, keepdims=True)


if __name__ == "__main__":
    state_size = 8
    action_size = 4
    batch = 2

    key = jax.random.PRNGKey(0)
    key, kx = jax.random.split(key)
    x = jax.random.normal(kx, (batch, state_size), jnp.float32)
    params = _make_params(key, state_size, action_size)

    q_ref = _reference_forward(x, params)

    # 1) Exact-semantics check with f32 MXU operands.
    prep_f32 = prepare_params(params, compute_dtype=jnp.float32)
    q32 = jax.block_until_ready(dueling_forward(x, prep_f32))
    assert q32.shape == (batch, action_size)
    assert jnp.allclose(q32, q_ref, atol=1e-4, rtol=1e-4), (q32, q_ref)

    # 2) Fast path: bf16 MXU operands, f32 accumulate / VPU math.
    prep_bf16 = prepare_params(params, compute_dtype=jnp.bfloat16)
    q16 = jax.block_until_ready(dueling_forward(x, prep_bf16))
    assert q16.shape == (batch, action_size)
    assert jnp.allclose(q16, q_ref, atol=5e-2, rtol=5e-2), (q16, q_ref)

    print("KERNEL_OK")
</pallas_src>

<mosaic_0001>
module attributes {stable_mosaic.version = 11 : i64} {
  func.func @_dueling_kernel(%arg0: i32, %arg1: memref<16x8xf32, #tpu.memory_space<vmem>>, %arg2: memref<8x64xf32, #tpu.memory_space<vmem>>, %arg3: memref<1x64xf32, #tpu.memory_space<vmem>>, %arg4: memref<64x64xf32, #tpu.memory_space<vmem>>, %arg5: memref<1x64xf32, #tpu.memory_space<vmem>>, %arg6: memref<64x64xf32, #tpu.memory_space<vmem>>, %arg7: memref<1x64xf32, #tpu.memory_space<vmem>>, %arg8: memref<64x5xf32, #tpu.memory_space<vmem>>, %arg9: memref<1x5xf32, #tpu.memory_space<vmem>>, %arg10: memref<16x4xf32, #tpu.memory_space<vmem>>) attributes {dimension_semantics = [#tpu.dimension_semantics<parallel>], iteration_bounds = array<i64: 1>, scalar_prefetch = 0 : i64, scratch_operands = 0 : i64, tpu.core_type = #tpu.core_type<tc>, window_params = [{transform_indices = @transform_0, window_bounds = array<i64: 16, 8>}, {pipeline_mode = #tpu.pipeline_mode<synchronous>, transform_indices = @transform_1, window_bounds = array<i64: 8, 64>}, {pipeline_mode = #tpu.pipeline_mode<synchronous>, transform_indices = @transform_2, window_bounds = array<i64: 1, 64>}, {pipeline_mode = #tpu.pipeline_mode<synchronous>, transform_indices = @transform_3, window_bounds = array<i64: 64, 64>}, {pipeline_mode = #tpu.pipeline_mode<synchronous>, transform_indices = @transform_4, window_bounds = array<i64: 1, 64>}, {pipeline_mode = #tpu.pipeline_mode<synchronous>, transform_indices = @transform_5, window_bounds = array<i64: 64, 64>}, {pipeline_mode = #tpu.pipeline_mode<synchronous>, transform_indices = @transform_6, window_bounds = array<i64: 1, 64>}, {pipeline_mode = #tpu.pipeline_mode<synchronous>, transform_indices = @transform_7, window_bounds = array<i64: 64, 5>}, {pipeline_mode = #tpu.pipeline_mode<synchronous>, transform_indices = @transform_8, window_bounds = array<i64: 1, 5>}, {transform_indices = @transform_9, window_bounds = array<i64: 16, 4>}]} {
    %c0 = arith.constant 0 : index
    %c0_0 = arith.constant 0 : index
    %0 = vector.load %arg1[%c0, %c0_0] : memref<16x8xf32, #tpu.memory_space<vmem>>, vector<16x8xf32>
    %c0_1 = arith.constant 0 : index
    %c0_2 = arith.constant 0 : index
    %1 = vector.load %arg2[%c0_1, %c0_2] : memref<8x64xf32, #tpu.memory_space<vmem>>, vector<8x64xf32>
    %cst = arith.constant dense<0.000000e+00> : vector<16x64xf32>
    %2 = tpu.matmul %0, %1, %cst {dimension_numbers = #tpu.dot_dimension_numbers<[1], [0], [0], [1], [0, 0, 1, 1], [], []>} : vector<16x8xf32>, vector<8x64xf32>, vector<16x64xf32> -> vector<16x64xf32>
    %c0_3 = arith.constant 0 : index
    %c0_4 = arith.constant 0 : index
    %3 = vector.load %arg3[%c0_3, %c0_4] : memref<1x64xf32, #tpu.memory_space<vmem>>, vector<1x64xf32>
    %4 = vector.broadcast %3 : vector<1x64xf32> to vector<16x64xf32>
    %5 = arith.addf %2, %4 : vector<16x64xf32>
    %cst_5 = arith.constant 0.000000e+00 : f32
    %6 = vector.broadcast %cst_5 : f32 to vector<16x64xf32>
    %7 = arith.maximumf %5, %6 : vector<16x64xf32>
    %c0_6 = arith.constant 0 : index
    %c0_7 = arith.constant 0 : index
    %8 = vector.load %arg4[%c0_6, %c0_7] : memref<64x64xf32, #tpu.memory_space<vmem>>, vector<64x64xf32>
    %cst_8 = arith.constant dense<0.000000e+00> : vector<16x64xf32>
    %9 = tpu.matmul %7, %8, %cst_8 {dimension_numbers = #tpu.dot_dimension_numbers<[1], [0], [0], [1], [0, 0, 1, 1], [], []>} : vector<16x64xf32>, vector<64x64xf32>, vector<16x64xf32> -> vector<16x64xf32>
    %c0_9 = arith.constant 0 : index
    %c0_10 = arith.constant 0 : index
    %10 = vector.load %arg5[%c0_9, %c0_10] : memref<1x64xf32, #tpu.memory_space<vmem>>, vector<1x64xf32>
    %11 = vector.broadcast %10 : vector<1x64xf32> to vector<16x64xf32>
    %12 = arith.addf %9, %11 : vector<16x64xf32>
    %cst_11 = arith.constant 0.000000e+00 : f32
    %13 = vector.broadcast %cst_11 : f32 to vector<16x64xf32>
    %14 = arith.maximumf %12, %13 : vector<16x64xf32>
    %c0_12 = arith.constant 0 : index
    %c0_13 = arith.constant 0 : index
    %15 = vector.load %arg6[%c0_12, %c0_13] : memref<64x64xf32, #tpu.memory_space<vmem>>, vector<64x64xf32>
    %cst_14 = arith.constant dense<0.000000e+00> : vector<16x64xf32>
    %16 = tpu.matmul %14, %15, %cst_14 {dimension_numbers = #tpu.dot_dimension_numbers<[1], [0], [0], [1], [0, 0, 1, 1], [], []>} : vector<16x64xf32>, vector<64x64xf32>, vector<16x64xf32> -> vector<16x64xf32>
    %c0_15 = arith.constant 0 : index
    %c0_16 = arith.constant 0 : index
    %17 = vector.load %arg7[%c0_15, %c0_16] : memref<1x64xf32, #tpu.memory_space<vmem>>, vector<1x64xf32>
    %18 = vector.broadcast %17 : vector<1x64xf32> to vector<16x64xf32>
    %19 = arith.addf %16, %18 : vector<16x64xf32>
    %cst_17 = arith.constant 0.000000e+00 : f32
    %20 = vector.broadcast %cst_17 : f32 to vector<16x64xf32>
    %21 = arith.maximumf %19, %20 : vector<16x64xf32>
    %c0_18 = arith.constant 0 : index
    %c0_19 = arith.constant 0 : index
    %22 = vector.load %arg8[%c0_18, %c0_19] : memref<64x5xf32, #tpu.memory_space<vmem>>, vector<64x5xf32>
    %cst_20 = arith.constant dense<0.000000e+00> : vector<16x5xf32>
    %23 = tpu.matmul %21, %22, %cst_20 {dimension_numbers = #tpu.dot_dimension_numbers<[1], [0], [0], [1], [0, 0, 1, 1], [], []>} : vector<16x64xf32>, vector<64x5xf32>, vector<16x5xf32> -> vector<16x5xf32>
    %c0_21 = arith.constant 0 : index
    %c0_22 = arith.constant 0 : index
    %24 = vector.load %arg9[%c0_21, %c0_22] : memref<1x5xf32, #tpu.memory_space<vmem>>, vector<1x5xf32>
    %25 = vector.broadcast %24 : vector<1x5xf32> to vector<16x5xf32>
    %26 = arith.addf %23, %25 : vector<16x5xf32>
    %27 = vector.extract_strided_slice %26 {offsets = [0, 0], sizes = [16, 1], strides = [1, 1]} : vector<16x5xf32> to vector<16x1xf32>
    %28 = vector.extract_strided_slice %26 {offsets = [0, 1], sizes = [16, 4], strides = [1, 1]} : vector<16x5xf32> to vector<16x4xf32>
    %29 = vector.broadcast %27 : vector<16x1xf32> to vector<16x4xf32>
    %30 = arith.addf %29, %28 : vector<16x4xf32>
    %cst_23 = arith.constant dense<0.000000e+00> : vector<16xf32>
    %31 = vector.multi_reduction <add>, %28, %cst_23 [1] : vector<16x4xf32> to vector<16xf32>
    %32 = vector.shape_cast %31 : vector<16xf32> to vector<16x1xf32>
    %cst_24 = arith.constant 4.000000e+00 : f32
    %33 = vector.broadcast %cst_24 : f32 to vector<16x1xf32>
    %34 = arith.divf %32, %33 : vector<16x1xf32>
    %35 = vector.broadcast %34 : vector<16x1xf32> to vector<16x4xf32>
    %36 = arith.subf %30, %35 : vector<16x4xf32>
    %c0_25 = arith.constant 0 : index
    %c0_26 = arith.constant 0 : index
    %37 = vector.load %arg10[%c0_25, %c0_26] : memref<16x4xf32, #tpu.memory_space<vmem>>, vector<16x4xf32>
    tpu.vector_store %arg10[%c0_25, %c0_26], %36 {strides = array<i32>} : memref<16x4xf32, #tpu.memory_space<vmem>>, vector<16x4xf32>,
    return
  }
  func.func @transform_0(%arg0: i32) -> (i32, i32) {
    %c0_i32 = arith.constant 0 : i32
    %c0_i32_0 = arith.constant 0 : i32
    return %arg0, %c0_i32 : i32, i32
  }
  func.func @transform_1(%arg0: i32) -> (i32, i32) {
    %c0_i32 = arith.constant 0 : i32
    %c0_i32_0 = arith.constant 0 : i32
    %c0_i32_1 = arith.constant 0 : i32
    return %c0_i32, %c0_i32_0 : i32, i32
  }
  func.func @transform_2(%arg0: i32) -> (i32, i32) {
    %c0_i32 = arith.constant 0 : i32
    %c0_i32_0 = arith.constant 0 : i32
    %c0_i32_1 = arith.constant 0 : i32
    return %c0_i32, %c0_i32_0 : i32, i32
  }
  func.func @transform_3(%arg0: i32) -> (i32, i32) {
    %c0_i32 = arith.constant 0 : i32
    %c0_i32_0 = arith.constant 0 : i32
    %c0_i32_1 = arith.constant 0 : i32
    return %c0_i32, %c0_i32_0 : i32, i32
  }
  func.func @transform_4(%arg0: i32) -> (i32, i32) {
    %c0_i32 = arith.constant 0 : i32
    %c0_i32_0 = arith.constant 0 : i32
    %c0_i32_1 = arith.constant 0 : i32
    return %c0_i32, %c0_i32_0 : i32, i32
  }
  func.func @transform_5(%arg0: i32) -> (i32, i32) {
    %c0_i32 = arith.constant 0 : i32
    %c0_i32_0 = arith.constant 0 : i32
    %c0_i32_1 = arith.constant 0 : i32
    return %c0_i32, %c0_i32_0 : i32, i32
  }
  func.func @transform_6(%arg0: i32) -> (i32, i32) {
    %c0_i32 = arith.constant 0 : i32
    %c0_i32_0 = arith.constant 0 : i32
    %c0_i32_1 = arith.constant 0 : i32
    return %c0_i32, %c0_i32_0 : i32, i32
  }
  func.func @transform_7(%arg0: i32) -> (i32, i32) {
    %c0_i32 = arith.constant 0 : i32
    %c0_i32_0 = arith.constant 0 : i32
    %c0_i32_1 = arith.constant 0 : i32
    return %c0_i32, %c0_i32_0 : i32, i32
  }
  func.func @transform_8(%arg0: i32) -> (i32, i32) {
    %c0_i32 = arith.constant 0 : i32
    %c0_i32_0 = arith.constant 0 : i32
    %c0_i32_1 = arith.constant 0 : i32
    return %c0_i32, %c0_i32_0 : i32, i32
  }
  func.func @transform_9(%arg0: i32) -> (i32, i32) {
    %c0_i32 = arith.constant 0 : i32
    %c0_i32_0 = arith.constant 0 : i32
    return %arg0, %c0_i32 : i32, i32
  }
}

</mosaic_0001>

<llo_original>
// kernel: tpu_custom_call.1
$region0: #{tpu_custom_call.1}
  #allocation0 [shape = 'u32[]', space=smem, size = 0x4, offset = 0x4, fixed_abs, tag = 'smem constant byte address 0x4 - core index']
  #allocation1 [shape = 'u32[144,128]{1,0:T(1,128)}', space=vmem, size = 0x12000, scoped, tag = 'internal scratch']
  %s0 = inlined_call_operand.vmem [shape: f32[16,8], index: 0, kind: input, shape index: {}]
  %s1 = inlined_call_operand.vmem [shape: f32[8,64], index: 1, kind: input, shape index: {}]
  %s2 = inlined_call_operand.vmem [shape: f32[1,64], index: 2, kind: input, shape index: {}]
  %s3 = inlined_call_operand.vmem [shape: f32[64,64], index: 3, kind: input, shape index: {}]
  %s4 = inlined_call_operand.vmem [shape: f32[1,64], index: 4, kind: input, shape index: {}]
  %s5 = inlined_call_operand.hbm [shape: f32[64,64], index: 5, kind: input, shape index: {}]
  %s6 = inlined_call_operand.vmem [shape: f32[1,64], index: 6, kind: input, shape index: {}]
  %s7 = inlined_call_operand.vmem [shape: f32[64,5], index: 7, kind: input, shape index: {}]
  %s8 = inlined_call_operand.vmem [shape: f32[1,5], index: 8, kind: input, shape index: {}]
  %s9 = inlined_call_operand.vmem [shape: f32[16,4], index: 9, kind: output, shape index: {}]
  %s10 = sld [smem:[#allocation0]]
  $region50: #{tpu_custom_call.1} parent=0
    _
  %s12 = ssub.s32 1, %s10
  %s13 = scalar_select 0, %s12, %s10
  $region1: #{tpu_custom_call.1} parent=0
    #allocation2 [shape = 'u8[32768]{0}', space=vmem, size = 0x8000, scoped, tag = 'input window, operand 5, single buffered']
    #allocation3 [shape = 's32[1]{0}', space=sflag, size = 0x4, scoped, tag = 'scoped memory for tpu_custom_call.1']
    %14 = vsyncpa [#allocation3], 0
    // Predicated region
    $region2: #{tpu_custom_call.1} parent=1 // pred_check
      _
    $region3: #{tpu_custom_call.1} parent=1 // pred_check_branch
      %16 = sbr.rel (0) target = $region5
    $region4: #{tpu_custom_call.1} parent=1 // pred_region
      _
    $region5: #{tpu_custom_call.1} parent=1 // pred_fallthru
      _
    // Predicated region
    $region6: #{tpu_custom_call.1} parent=1 // pred_check
      _
    $region7: #{tpu_custom_call.1} parent=1 // pred_check_branch
      %18 = sbr.rel (0) target = $region9
    $region8: #{tpu_custom_call.1} parent=1 // pred_region
      _
    $region9: #{tpu_custom_call.1} parent=1 // pred_fallthru
      _
    // Predicated region
    $region10: #{tpu_custom_call.1} parent=1 // pred_check
      _
    $region11: #{tpu_custom_call.1} parent=1 // pred_check_branch
      %20 = sbr.rel (0) target = $region13
    $region12: #{tpu_custom_call.1} parent=1 // pred_region
      _
    $region13: #{tpu_custom_call.1} parent=1 // pred_fallthru
      _
    // Predicated region
    $region14: #{tpu_custom_call.1} parent=1 // pred_check
      _
    $region15: #{tpu_custom_call.1} parent=1 // pred_check_branch
      %22 = sbr.rel (0) target = $region17
    $region16: #{tpu_custom_call.1} parent=1 // pred_region
      _
    $region17: #{tpu_custom_call.1} parent=1 // pred_fallthru
      _
    // Predicated region
    $region18: #{tpu_custom_call.1} parent=1 // pred_check
      _
    $region19: #{tpu_custom_call.1} parent=1 // pred_check_branch
      %24 = sbr.rel (0) target = $region21
    $region20: #{tpu_custom_call.1} parent=1 // pred_region
      _
    $region21: #{tpu_custom_call.1} parent=1 // pred_fallthru
      _
    // Predicated region
    $region22: #{tpu_custom_call.1} parent=1 // pred_check
      _
    $region23: #{tpu_custom_call.1} parent=1 // pred_check_branch
      %26 = sbr.rel (0) target = $region25
    $region24: #{tpu_custom_call.1} parent=1 // pred_region
      %s28 = ssub.s32 1024, 1024
      %29 = vsyncadd [#allocation3], %s28
      %s30 = sshll.u32 [#allocation2], 4
      %s31 = int_to_ptr.vmem [resolvable:$true] %s30
      %36 = dma.hbm_to_vmem [thread:$0]  %s5, 1024, %s31, [#allocation3], 128, 128, 8
    $region25: #{tpu_custom_call.1} parent=1 // pred_fallthru
      _
    // Predicated region
    $region26: #{tpu_custom_call.1} parent=1 // pred_check
      _
    $region27: #{tpu_custom_call.1} parent=1 // pred_check_branch
      %38 = sbr.rel (0) target = $region29
    $region28: #{tpu_custom_call.1} parent=1 // pred_region
      _
    $region29: #{tpu_custom_call.1} parent=1 // pred_fallthru
      _
    // Predicated region
    $region30: #{tpu_custom_call.1} parent=1 // pred_check
      _
    $region31: #{tpu_custom_call.1} parent=1 // pred_check_branch
      %40 = sbr.rel (0) target = $region33
    $region32: #{tpu_custom_call.1} parent=1 // pred_region
      _
    $region33: #{tpu_custom_call.1} parent=1 // pred_fallthru
      _
    // Predicated region
    $region34: #{tpu_custom_call.1} parent=1 // pred_check
      _
    $region35: #{tpu_custom_call.1} parent=1 // pred_check_branch
      %42 = sbr.rel (0) target = $region37
    $region36: #{tpu_custom_call.1} parent=1 // pred_region
      _
    $region37: #{tpu_custom_call.1} parent=1 // pred_fallthru
      _
    // Predicated region
    $region38: #{tpu_custom_call.1} parent=1 // pred_check
      _
    $region39: #{tpu_custom_call.1} parent=1 // pred_check_branch
      %44 = sbr.rel (0) target = $region41
    $region40: #{tpu_custom_call.1} parent=1 // pred_region
      %45 = dma.done [#allocation3], 1024
    $region41: #{tpu_custom_call.1} parent=1 // pred_fallthru
      _
    %v46 = vld [vmem:[%s0] sm:$0xff]
    %v47 = vld [vmem:[%s0 + $0x8] sm:$0xff]
    %v48 = vld [vmem:[%s1] sm:$0xff]
    %v49 = vld [vmem:[%s2] sm:$0x1]
    %v51 = vlaneseq
    %v52 = vshrl.u32 %v51, 7
    %v53 = vsub.s32 0, %v52
    %v54 = vrot.slane %v49, %v53
    %vm56 = vcmask 64512
    %v58 = vsel %vm56, %v46, 0
    %v61 = vsel %vm56, %v47, 0
    %63 = vmatprep.subr.mxu0 0.0
    %64 = vmatpush1.msra.mxu0 %v48
    %65 = vmatprep.subr.mxu0 0.0
    %66 = vmatpush1.msra.mxu0 0.0
    %67 = vmatprep.subr.mxu0 0.0
    %68 = vmatpush1.msra.mxu0 0.0
    %69 = vmatprep.subr.mxu0 0.0
    %70 = vmatpush1.msra.mxu0 0.0
    %71 = vmatprep.subr.mxu0 0.0
    %72 = vmatpush1.msra.mxu0 0.0
    %73 = vmatprep.subr.mxu0 0.0
    %74 = vmatpush1.msra.mxu0 0.0
    %75 = vmatprep.subr.mxu0 0.0
    %76 = vmatpush1.msra.mxu0 0.0
    %77 = vmatprep.subr.mxu0 0.0
    %78 = vmatpush1.msra.mxu0 0.0
    %79 = vmatprep.subr.mxu0 0.0
    %80 = vmatpush1.msra.mxu0 0.0
    %81 = vmatprep.subr.mxu0 0.0
    %82 = vmatpush1.msra.mxu0 0.0
    %83 = vmatprep.subr.mxu0 0.0
    %84 = vmatpush1.msra.mxu0 0.0
    %85 = vmatprep.subr.mxu0 0.0
    %86 = vmatpush1.msra.mxu0 0.0
    %87 = vmatprep.subr.mxu0 0.0
    %88 = vmatpush1.msra.mxu0 0.0
    %89 = vmatprep.subr.mxu0 0.0
    %90 = vmatpush1.msra.mxu0 0.0
    %91 = vmatprep.subr.mxu0 0.0
    %92 = vmatpush1.msra.mxu0 0.0
    %93 = vmatprep.subr.mxu0 0.0
    %94 = vmatpush1.msra.mxu0 0.0
    %95 = vmatprep.subr.mxu0 0.0
    %96 = vmatpush1.msra.mxu0 0.0
    %97 = vmatprep.subr.mxu0 0.0
    %98 = vmatpush1.msra.mxu0 0.0
    %99 = vmatprep.subr.mxu0 0.0
    %100 = vmatpush1.msra.mxu0 0.0
    %101 = vmatprep.subr.mxu0 0.0
    %102 = vmatpush1.msra.mxu0 0.0
    %103 = vmatprep.subr.mxu0 0.0
    %104 = vmatpush1.msra.mxu0 0.0
    %105 = vmatprep.subr.mxu0 0.0
    %106 = vmatpush1.msra.mxu0 0.0
    %107 = vmatprep.subr.mxu0 0.0
    %108 = vmatpush1.msra.mxu0 0.0
    %109 = vmatprep.subr.mxu0 0.0
    %110 = vmatpush1.msra.mxu0 0.0
    %111 = vmatprep.subr.mxu0 0.0
    %112 = vmatpush1.msra.mxu0 0.0
    %113 = vmatprep.subr.mxu0 0.0
    %114 = vmatpush1.msra.mxu0 0.0
    %115 = vmatprep.subr.mxu0 0.0
    %116 = vmatpush1.msra.mxu0 0.0
    %117 = vmatprep.subr.mxu0 0.0
    %118 = vmatpush1.msra.mxu0 0.0
    %119 = vmatprep.subr.mxu0 0.0
    %120 = vmatpush1.msra.mxu0 0.0
    %121 = vmatprep.subr.mxu0 0.0
    %122 = vmatpush1.msra.mxu0 0.0
    %123 = vmatprep.subr.mxu0 0.0
    %124 = vmatpush1.msra.mxu0 0.0
    %125 = vmatprep.subr.mxu0 0.0
    %126 = vmatpush1.msra.mxu0 0.0
    %127 = vmatprep.mubr.f32.mxu0 0.0
    %128 = vmatmul.mubr.f32.gmra.mrb[0].mxu0 %v58
    %v129 = vpop.f32.mrb[0].mxu0
    %v130 = vadd.f32 %v54, %v129
    %v131 = vpop.f32.mrb[0].mxu0
    %132 = vmatprep.mubr.f32.mxu0 0.0
    %133 = vmatmul.mubr.f32.gmra.mrb[0].mxu0 %v61
    %v134 = vpop.f32.mrb[0].mxu0
    %v135 = vadd.f32 %v54, %v134
    %v136 = vpop.f32.mrb[0].mxu0
    %137 = vdwg.mxu0
    %v138 = vmax.f32 %v130, 0.0
    %v139 = vmax.f32 %v135, 0.0
    %v140 = vld [vmem:[%s3] sm:$0xff]
    %v141 = vld [vmem:[%s3 + $0x8] sm:$0xff]
    %v142 = vld [vmem:[%s3 + $0x10] sm:$0xff]
    %v143 = vld [vmem:[%s3 + $0x18] sm:$0xff]
    %v144 = vld [vmem:[%s3 + $0x20] sm:$0xff]
    %v145 = vld [vmem:[%s3 + $0x28] sm:$0xff]
    %v146 = vld [vmem:[%s3 + $0x30] sm:$0xff]
    %v147 = vld [vmem:[%s3 + $0x38] sm:$0xff]
    %v148 = vld [vmem:[%s4] sm:$0x1]
    %v150 = vlaneseq
    %v151 = vshrl.u32 %v150, 7
    %v152 = vsub.s32 0, %v151
    %v153 = vrot.slane %v148, %v152
    %vm155 = vcmask 523264
    %v157 = vsel %vm155, %v138, 0
    %v160 = vsel %vm155, %v139, 0
    %162 = vmatprep.subr.mxu0 0.0
    %163 = vmatpush1.msra.mxu0 %v140
    %164 = vmatprep.subr.mxu0 0.0
    %165 = vmatpush1.msra.mxu0 %v141
    %166 = vmatprep.subr.mxu0 0.0
    %167 = vmatpush1.msra.mxu0 %v142
    %168 = vmatprep.subr.mxu0 0.0
    %169 = vmatpush1.msra.mxu0 %v143
    %170 = vmatprep.subr.mxu0 0.0
    %171 = vmatpush1.msra.mxu0 %v144
    %172 = vmatprep.subr.mxu0 0.0
    %173 = vmatpush1.msra.mxu0 %v145
    %174 = vmatprep.subr.mxu0 0.0
    %175 = vmatpush1.msra.mxu0 %v146
    %176 = vmatprep.subr.mxu0 0.0
    %177 = vmatpush1.msra.mxu0 %v147
    %178 = vmatprep.subr.mxu0 0.0
    %179 = vmatpush1.msra.mxu0 0.0
    %180 = vmatprep.subr.mxu0 0.0
    %181 = vmatpush1.msra.mxu0 0.0
    %182 = vmatprep.subr.mxu0 0.0
    %183 = vmatpush1.msra.mxu0 0.0
    %184 = vmatprep.subr.mxu0 0.0
    %185 = vmatpush1.msra.mxu0 0.0
    %186 = vmatprep.subr.mxu0 0.0
    %187 = vmatpush1.msra.mxu0 0.0
    %188 = vmatprep.subr.mxu0 0.0
    %189 = vmatpush1.msra.mxu0 0.0
    %190 = vmatprep.subr.mxu0 0.0
    %191 = vmatpush1.msra.mxu0 0.0
    %192 = vmatprep.subr.mxu0 0.0
    %193 = vmatpush1.msra.mxu0 0.0
    %194 = vmatprep.subr.mxu0 0.0
    %195 = vmatpush1.msra.mxu0 0.0
    %196 = vmatprep.subr.mxu0 0.0
    %197 = vmatpush1.msra.mxu0 0.0
    %198 = vmatprep.subr.mxu0 0.0
    %199 = vmatpush1.msra.mxu0 0.0
    %200 = vmatprep.subr.mxu0 0.0
    %201 = vmatpush1.msra.mxu0 0.0
    %202 = vmatprep.subr.mxu0 0.0
    %203 = vmatpush1.msra.mxu0 0.0
    %204 = vmatprep.subr.mxu0 0.0
    %205 = vmatpush1.msra.mxu0 0.0
    %206 = vmatprep.subr.mxu0 0.0
    %207 = vmatpush1.msra.mxu0 0.0
    %208 = vmatprep.subr.mxu0 0.0
    %209 = vmatpush1.msra.mxu0 0.0
    %210 = vmatprep.subr.mxu0 0.0
    %211 = vmatpush1.msra.mxu0 0.0
    %212 = vmatprep.subr.mxu0 0.0
    %213 = vmatpush1.msra.mxu0 0.0
    %214 = vmatprep.subr.mxu0 0.0
    %215 = vmatpush1.msra.mxu0 0.0
    %216 = vmatprep.subr.mxu0 0.0
    %217 = vmatpush1.msra.mxu0 0.0
    %218 = vmatprep.subr.mxu0 0.0
    %219 = vmatpush1.msra.mxu0 0.0
    %220 = vmatprep.subr.mxu0 0.0
    %221 = vmatpush1.msra.mxu0 0.0
    %222 = vmatprep.subr.mxu0 0.0
    %223 = vmatpush1.msra.mxu0 0.0
    %224 = vmatprep.subr.mxu0 0.0
    %225 = vmatpush1.msra.mxu0 0.0
    %226 = vmatprep.mubr.f32.mxu0 0.0
    %227 = vmatmul.mubr.f32.gmra.mrb[0].mxu0 %v157
    %v228 = vpop.f32.mrb[0].mxu0
    %v229 = vadd.f32 %v153, %v228
    %v230 = vpop.f32.mrb[0].mxu0
    %231 = vmatprep.mubr.f32.mxu0 0.0
    %232 = vmatmul.mubr.f32.gmra.mrb[0].mxu0 %v160
    %v233 = vpop.f32.mrb[0].mxu0
    %v234 = vadd.f32 %v153, %v233
    %v235 = vpop.f32.mrb[0].mxu0
    %236 = vdwg.mxu0
    %v237 = vmax.f32 %v229, 0.0
    %v238 = vmax.f32 %v234, 0.0
    %v239 = vld [vmem:[#allocation2] sm:$0xff]
    %v240 = vld [vmem:[#allocation2 + $0x8] sm:$0xff]
    %v241 = vld [vmem:[#allocation2 + $0x10] sm:$0xff]
    %v242 = vld [vmem:[#allocation2 + $0x18] sm:$0xff]
    %v243 = vld [vmem:[#allocation2 + $0x20] sm:$0xff]
    %v244 = vld [vmem:[#allocation2 + $0x28] sm:$0xff]
    %v245 = vld [vmem:[#allocation2 + $0x30] sm:$0xff]
    %v246 = vld [vmem:[#allocation2 + $0x38] sm:$0xff]
    %v247 = vld [vmem:[%s6] sm:$0x1]
    %v249 = vlaneseq
    %v250 = vshrl.u32 %v249, 7
    %v251 = vsub.s32 0, %v250
    %v252 = vrot.slane %v247, %v251
    %v255 = vsel %vm155, %v237, 0
    %v258 = vsel %vm155, %v238, 0
    %260 = vmatprep.subr.mxu0 0.0
    %261 = vmatpush1.msra.mxu0 %v239
    %262 = vmatprep.subr.mxu0 0.0
    %263 = vmatpush1.msra.mxu0 %v240
    %264 = vmatprep.subr.mxu0 0.0
    %265 = vmatpush1.msra.mxu0 %v241
    %266 = vmatprep.subr.mxu0 0.0
    %267 = vmatpush1.msra.mxu0 %v242
    %268 = vmatprep.subr.mxu0 0.0
    %269 = vmatpush1.msra.mxu0 %v243
    %270 = vmatprep.subr.mxu0 0.0
    %271 = vmatpush1.msra.mxu0 %v244
    %272 = vmatprep.subr.mxu0 0.0
    %273 = vmatpush1.msra.mxu0 %v245
    %274 = vmatprep.subr.mxu0 0.0
    %275 = vmatpush1.msra.mxu0 %v246
    %276 = vmatprep.subr.mxu0 0.0
    %277 = vmatpush1.msra.mxu0 0.0
    %278 = vmatprep.subr.mxu0 0.0
    %279 = vmatpush1.msra.mxu0 0.0
    %280 = vmatprep.subr.mxu0 0.0
    %281 = vmatpush1.msra.mxu0 0.0
    %282 = vmatprep.subr.mxu0 0.0
    %283 = vmatpush1.msra.mxu0 0.0
    %284 = vmatprep.subr.mxu0 0.0
    %285 = vmatpush1.msra.mxu0 0.0
    %286 = vmatprep.subr.mxu0 0.0
    %287 = vmatpush1.msra.mxu0 0.0
    %288 = vmatprep.subr.mxu0 0.0
    %289 = vmatpush1.msra.mxu0 0.0
    %290 = vmatprep.subr.mxu0 0.0
    %291 = vmatpush1.msra.mxu0 0.0
    %292 = vmatprep.subr.mxu0 0.0
    %293 = vmatpush1.msra.mxu0 0.0
    %294 = vmatprep.subr.mxu0 0.0
    %295 = vmatpush1.msra.mxu0 0.0
    %296 = vmatprep.subr.mxu0 0.0
    %297 = vmatpush1.msra.mxu0 0.0
    %298 = vmatprep.subr.mxu0 0.0
    %299 = vmatpush1.msra.mxu0 0.0
    %300 = vmatprep.subr.mxu0 0.0
    %301 = vmatpush1.msra.mxu0 0.0
    %302 = vmatprep.subr.mxu0 0.0
    %303 = vmatpush1.msra.mxu0 0.0
    %304 = vmatprep.subr.mxu0 0.0
    %305 = vmatpush1.msra.mxu0 0.0
    %306 = vmatprep.subr.mxu0 0.0
    %307 = vmatpush1.msra.mxu0 0.0
    %308 = vmatprep.subr.mxu0 0.0
    %309 = vmatpush1.msra.mxu0 0.0
    %310 = vmatprep.subr.mxu0 0.0
    %311 = vmatpush1.msra.mxu0 0.0
    %312 = vmatprep.subr.mxu0 0.0
    %313 = vmatpush1.msra.mxu0 0.0
    %314 = vmatprep.subr.mxu0 0.0
    %315 = vmatpush1.msra.mxu0 0.0
    %316 = vmatprep.subr.mxu0 0.0
    %317 = vmatpush1.msra.mxu0 0.0
    %318 = vmatprep.subr.mxu0 0.0
    %319 = vmatpush1.msra.mxu0 0.0
    %320 = vmatprep.subr.mxu0 0.0
    %321 = vmatpush1.msra.mxu0 0.0
    %322 = vmatprep.subr.mxu0 0.0
    %323 = vmatpush1.msra.mxu0 0.0
    %324 = vmatprep.mubr.f32.mxu0 0.0
    %325 = vmatmul.mubr.f32.gmra.mrb[0].mxu0 %v255
    %v326 = vpop.f32.mrb[0].mxu0
    %v327 = vadd.f32 %v252, %v326
    %v328 = vpop.f32.mrb[0].mxu0
    %329 = vmatprep.mubr.f32.mxu0 0.0
    %330 = vmatmul.mubr.f32.gmra.mrb[0].mxu0 %v258
    %v331 = vpop.f32.mrb[0].mxu0
    %v332 = vadd.f32 %v252, %v331
    %v333 = vpop.f32.mrb[0].mxu0
    %334 = vdwg.mxu0
    %v335 = vmax.f32 %v327, 0.0
    %v336 = vmax.f32 %v332, 0.0
    %v337 = vld [vmem:[%s7] sm:$0xff]
    %v338 = vld [vmem:[%s7 + $0x8] sm:$0xff]
    %v339 = vld [vmem:[%s7 + $0x10] sm:$0xff]
    %v340 = vld [vmem:[%s7 + $0x18] sm:$0xff]
    %v341 = vld [vmem:[%s7 + $0x20] sm:$0xff]
    %v342 = vld [vmem:[%s7 + $0x28] sm:$0xff]
    %v343 = vld [vmem:[%s7 + $0x30] sm:$0xff]
    %v344 = vld [vmem:[%s7 + $0x38] sm:$0xff]
    %v345 = vld [vmem:[%s8] sm:$0x1]
    %v347 = vlaneseq
    %v348 = vshrl.u32 %v347, 7
    %v349 = vsub.s32 0, %v348
    %v350 = vrot.slane %v345, %v349
    %v353 = vsel %vm155, %v335, 0
    %v356 = vsel %vm155, %v336, 0
    %358 = vmatprep.subr.mxu0 0.0
    %359 = vmatpush1.msra.mxu0 %v337
    %360 = vmatprep.subr.mxu0 0.0
    %361 = vmatpush1.msra.mxu0 %v338
    %362 = vmatprep.subr.mxu0 0.0
    %363 = vmatpush1.msra.mxu0 %v339
    %364 = vmatprep.subr.mxu0 0.0
    %365 = vmatpush1.msra.mxu0 %v340
    %366 = vmatprep.subr.mxu0 0.0
    %367 = vmatpush1.msra.mxu0 %v341
    %368 = vmatprep.subr.mxu0 0.0
    %369 = vmatpush1.msra.mxu0 %v342
    %370 = vmatprep.subr.mxu0 0.0
    %371 = vmatpush1.msra.mxu0 %v343
    %372 = vmatprep.subr.mxu0 0.0
    %373 = vmatpush1.msra.mxu0 %v344
    %374 = vmatprep.subr.mxu0 0.0
    %375 = vmatpush1.msra.mxu0 0.0
    %376 = vmatprep.subr.mxu0 0.0
    %377 = vmatpush1.msra.mxu0 0.0
    %378 = vmatprep.subr.mxu0 0.0
    %379 = vmatpush1.msra.mxu0 0.0
    %380 = vmatprep.subr.mxu0 0.0
    %381 = vmatpush1.msra.mxu0 0.0
    %382 = vmatprep.subr.mxu0 0.0
    %383 = vmatpush1.msra.mxu0 0.0
    %384 = vmatprep.subr.mxu0 0.0
    %385 = vmatpush1.msra.mxu0 0.0
    %386 = vmatprep.subr.mxu0 0.0
    %387 = vmatpush1.msra.mxu0 0.0
    %388 = vmatprep.subr.mxu0 0.0
    %389 = vmatpush1.msra.mxu0 0.0
    %390 = vmatprep.subr.mxu0 0.0
    %391 = vmatpush1.msra.mxu0 0.0
    %392 = vmatprep.subr.mxu0 0.0
    %393 = vmatpush1.msra.mxu0 0.0
    %394 = vmatprep.subr.mxu0 0.0
    %395 = vmatpush1.msra.mxu0 0.0
    %396 = vmatprep.subr.mxu0 0.0
    %397 = vmatpush1.msra.mxu0 0.0
    %398 = vmatprep.subr.mxu0 0.0
    %399 = vmatpush1.msra.mxu0 0.0
    %400 = vmatprep.subr.mxu0 0.0
    %401 = vmatpush1.msra.mxu0 0.0
    %402 = vmatprep.subr.mxu0 0.0
    %403 = vmatpush1.msra.mxu0 0.0
    %404 = vmatprep.subr.mxu0 0.0
    %405 = vmatpush1.msra.mxu0 0.0
    %406 = vmatprep.subr.mxu0 0.0
    %407 = vmatpush1.msra.mxu0 0.0
    %408 = vmatprep.subr.mxu0 0.0
    %409 = vmatpush1.msra.mxu0 0.0
    %410 = vmatprep.subr.mxu0 0.0
    %411 = vmatpush1.msra.mxu0 0.0
    %412 = vmatprep.subr.mxu0 0.0
    %413 = vmatpush1.msra.mxu0 0.0
    %414 = vmatprep.subr.mxu0 0.0
    %415 = vmatpush1.msra.mxu0 0.0
    %416 = vmatprep.subr.mxu0 0.0
    %417 = vmatpush1.msra.mxu0 0.0
    %418 = vmatprep.subr.mxu0 0.0
    %419 = vmatpush1.msra.mxu0 0.0
    %420 = vmatprep.subr.mxu0 0.0
    %421 = vmatpush1.msra.mxu0 0.0
    %422 = vmatprep.mubr.f32.mxu0 0.0
    %423 = vmatmul.mubr.f32.gmra.mrb[0].mxu0 %v353
    %v424 = vpop.f32.mrb[0].mxu0
    %v425 = vadd.f32 %v350, %v424
    %v426 = vpop.f32.mrb[0].mxu0
    %427 = vmatprep.mubr.f32.mxu0 0.0
    %428 = vmatmul.mubr.f32.gmra.mrb[0].mxu0 %v356
    %v429 = vpop.f32.mrb[0].mxu0
    %v430 = vadd.f32 %v350, %v429
    %v431 = vpop.f32.mrb[0].mxu0
    %432 = vdwg.mxu0
    %434 = vset.pattern.permute.xlu0 0
    %435 = vperm.xlu0 %434, %v425
    %v436 = vpop.permute.xlu0 %435
    %439 = vset.pattern.permute.xlu0 0
    %440 = vperm.xlu0 %439, %v430
    %v441 = vpop.permute.xlu0 %440
    %v443 = vadd.f32 %v436, %v425
    %v444 = vadd.f32 %v441, %v430
    %445 = vrot.lane.b32.xlu0 %v425, 127
    %v446 = vpop.permute.xlu0 %445
    %447 = vrot.lane.b32.xlu0 %v430, 127
    %v448 = vpop.permute.xlu0 %447
    %vm451 = vcmask 31744
    %v452 = vsel %vm451, %v446, 0.0
    %453 = vadd.xlane.f32.xlu0 %v452
    %v454 = vpop.xlane.xlu0 %453
    %v455 = vsel %vm451, %v448, 0.0
    %456 = vadd.xlane.f32.xlu0 %v455
    %v457 = vpop.xlane.xlu0 %456
    %v458 = vrcp.pop 4.0
    %v459 = vmul.f32 %v454, %v458
    %v460 = vmul.f32 %v457, %v458
    %v461 = vsub.f32 %v443, %v459
    %v462 = vsub.f32 %v444, %v460
    %465 = vrot.lane.b32.xlu0 %v461, 127
    %v466 = vpop.permute.xlu0 %465
    %467 = vrot.lane.b32.xlu0 %v462, 127
    %v468 = vpop.permute.xlu0 %467
    %471 = vst.msk [vmem:[%s9] sm:$0xff] %vm451, %v466
    %472 = vst.msk [vmem:[%s9 + $0x8] sm:$0xff] %vm451, %v468
    // Predicated region
    $region42: #{tpu_custom_call.1} parent=1 // pred_check
      _
    $region43: #{tpu_custom_call.1} parent=1 // pred_check_branch
      %474 = sbr.rel (0) target = $region45
    $region44: #{tpu_custom_call.1} parent=1 // pred_region
      _
    $region45: #{tpu_custom_call.1} parent=1 // pred_fallthru
      _
    // Predicated region
    $region46: #{tpu_custom_call.1} parent=1 // pred_check
      _
    $region47: #{tpu_custom_call.1} parent=1 // pred_check_branch
      %476 = sbr.rel (0) target = $region49
    $region48: #{tpu_custom_call.1} parent=1 // pred_region
      _
    $region49: #{tpu_custom_call.1} parent=1 // pred_fallthru
      _
    %477 = vsyncpa [#allocation3], 1

</llo_original>
